<compile_context>
chip_gen: v6e
topology: v6e:2x2x1
jax: 0.10.0
libtpu: 0.0.40
codegen_flags: <defaults>
</compile_context>

<pallas_src>
from functools import partial

import jax
import jax.numpy as jnp
from jax import lax
from jax.experimental import pallas as pl
from jax.experimental.pallas import tpu as pltpu


# --------------------------- configs (synthetic) ----------------------------
class configs:
    require_undirected = 1        # Critic.forward symmetrizes edge_index when == 1


LEAKY_SLOPE = 0.2                 # GATConv default negative_slope
NEG_BIG = -1e30


# ------------------------------ helpers -------------------------------------
def init_linear(key, fan_in, fan_out):
    """PyTorch nn.Linear default init; weight stored (in, out) for x @ W."""
    kw, kb = jax.random.split(key)
    bound = 1.0 / jnp.sqrt(jnp.float32(fan_in))
    w = jax.random.uniform(kw, (fan_in, fan_out), jnp.float32, -bound, bound)
    b = jax.random.uniform(kb, (1, fan_out), jnp.float32, -bound, bound)
    return w, b


# ------------------------------ fused kernel --------------------------------
def fused_critic_kernel(x_ref, ei_ref, mb_ref, w_ref, v_ref, out_ref):
    N, Fin = x_ref.shape
    E = ei_ref.shape[1]
    H = w_ref.shape[1]
    B = out_ref.shape[0]

    x = x_ref[...]                                             # (N, Fin)

    # ---- symmetrized adjacency counts, ONE MXU pass over bf16 one-hots ----
    # A[t, s] = #edges s->t in cat(edge_index, edge_index.flip(0))
    node_iota = lax.broadcasted_iota(jnp.int32, (N, E), 0)     # node id on sublanes
    src = ei_ref[0:1, :]                                       # (1, E)
    tgt = ei_ref[1:2, :]
    oh_src = jnp.where(node_iota == src, 1.0, 0.0).astype(jnp.bfloat16)   # (N, E)
    oh_tgt = jnp.where(node_iota == tgt, 1.0, 0.0).astype(jnp.bfloat16)
    lhs = jnp.concatenate([oh_tgt, oh_src], axis=1)            # (N, 2E)
    rhs = jnp.concatenate([oh_src, oh_tgt], axis=1)            # (N, 2E)
    adj = lax.dot_general(lhs, rhs, (((1,), (1,)), ((), ())),
                          preferred_element_type=jnp.float32)  # (N, N) edge counts
    # GATConv(add_self_loops=True): drop existing self loops, add exactly one
    rows = lax.broadcasted_iota(jnp.int32, (N, N), 0)
    cols = lax.broadcasted_iota(jnp.int32, (N, N), 1)
    eye = jnp.where(rows == cols, 1.0, 0.0)
    adj = adj * (1.0 - eye) + eye

    # ---- packed parameter slabs, sliced at static offsets ----
    w0 = w_ref[0:Fin, :]                                       # GAT layer 0 lin
    w1 = w_ref[Fin:Fin + H, :]                                 # GAT layer 1 lin
    wc1 = w_ref[Fin + H:Fin + 2 * H, :]                        # critic Linear(H,H)
    as0, ad0, b0 = v_ref[0:1, :], v_ref[1:2, :], v_ref[2:3, :]
    as1, ad1, b1 = v_ref[3:4, :], v_ref[4:5, :], v_ref[5:6, :]
    cb1 = v_ref[6:7, :]
    wc2_row = v_ref[7:8, :]                                    # critic Linear(H,1) weight
    cb2 = v_ref[8:9, 0:1]                                      # its bias (scalar)

    # ---- GATConv(heads=1) + ELU (as in GATlayer, dropout p=0 -> identity) ----
    def gat_layer(h, w, att_s, att_d, bias):
        xw = jnp.dot(h, w, preferred_element_type=jnp.float32)          # (N, H)
        a_s = jnp.sum(xw * att_s, axis=1, keepdims=True)                # (N, 1)
        a_d = jnp.sum(xw * att_d, axis=1, keepdims=True)                # (N, 1)
        e = a_d + jnp.transpose(a_s)                                    # e[i,j]=a_d[i]+a_s[j]
        e = jnp.where(e > 0, e, LEAKY_SLOPE * e)                        # LeakyReLU(0.2)
        e_masked = jnp.where(adj > 0, e, NEG_BIG)
        m = jnp.max(e_masked, axis=1, keepdims=True)                    # stable softmax
        num = adj * jnp.exp(e_masked - m)                               # multiplicity-weighted
        denom = jnp.sum(num, axis=1, keepdims=True)
        out = jnp.dot(num, xw, preferred_element_type=jnp.float32) / denom + bias
        return jnp.where(out > 0, out, jnp.exp(jnp.minimum(out, 0.0)) - 1.0)   # ELU

    h0 = gat_layer(x, w0, as0, ad0, b0)                        # (N, H)
    h1 = gat_layer(h0, w1, as1, ad1, b1)                       # (N, H)

    # ---- global_mean_pool(wf_task_embed[mask], batch[mask]) via one-hot matmul ----
    mask = mb_ref[0:1, :]                                      # (1, N) int32 0/1
    batch = mb_ref[1:2, :]                                     # (1, N) graph index
    b_iota = lax.broadcasted_iota(jnp.int32, (B, N), 0)
    pool = jnp.where((b_iota == batch) & (mask > 0), 1.0, 0.0)           # (B, N)
    cnt = jnp.sum(pool, axis=1, keepdims=True)
    pooled = (jnp.dot(pool, h1, preferred_element_type=jnp.float32)
              / jnp.maximum(cnt, 1.0))                                    # (B, H)

    # ---- critic MLP: Linear(H,H) -> ReLU -> Linear(H,1) ----
    hid = jnp.maximum(
        jnp.dot(pooled, wc1, preferred_element_type=jnp.float32) + cb1, 0.0)
    out_ref[...] = jnp.sum(hid * wc2_row, axis=1, keepdims=True) + cb2   # (B, 1)


# ------------------------------ wrapper --------------------------------------
def _vspec():
    return pl.BlockSpec(memory_space=pltpu.MemorySpace.VMEM)


@partial(jax.jit, static_argnames=("batch_size",))
def critic_forward(state_wf, edge_index_wf, mask_batch, w_slab, v_slab, *, batch_size):
    """values = Critic(state_wf, edge_index_wf, mask_wf, batch_wf, ...)  -> (B,)"""
    out = pl.pallas_call(
        fused_critic_kernel,
        out_shape=jax.ShapeDtypeStruct((batch_size, 1), jnp.float32),
        in_specs=[_vspec()] * 5,
        out_specs=_vspec(),
    )(state_wf, edge_index_wf, mask_batch, w_slab, v_slab)
    return out[:, 0]                                            # values.squeeze()


# ------------------------------ main -----------------------------------------
if __name__ == "__main__":
    key = jax.random.PRNGKey(0)
    keys = jax.random.split(key, 16)

    input_dim_wf, input_dim_vm = 5, 3
    hidden_dim = 32                     # raising toward 128 is near-free (vreg padding)
    N = 32                              # nodes
    E = 48                              # directed edges (pre-symmetrization)
    B = 2                               # graphs in the batch
    in_dim = input_dim_wf + input_dim_vm

    # GATConv params (heads=1): lin weight (in,out), att_src/att_dst (1,out), bias
    w0, _ = init_linear(keys[0], in_dim, hidden_dim)
    as0 = 0.1 * jax.random.normal(keys[1], (1, hidden_dim), jnp.float32)
    ad0 = 0.1 * jax.random.normal(keys[2], (1, hidden_dim), jnp.float32)
    b0 = jnp.zeros((1, hidden_dim), jnp.float32)
    w1, _ = init_linear(keys[3], hidden_dim, hidden_dim)
    as1 = 0.1 * jax.random.normal(keys[4], (1, hidden_dim), jnp.float32)
    ad1 = 0.1 * jax.random.normal(keys[5], (1, hidden_dim), jnp.float32)
    b1 = jnp.zeros((1, hidden_dim), jnp.float32)
    # critic MLP (mlp_layers=2): Linear(H,H) -> ReLU -> Linear(H,1)
    wc1, cb1 = init_linear(keys[6], hidden_dim, hidden_dim)
    wc2, cb2 = init_linear(keys[7], hidden_dim, 1)

    # two packed parameter slabs (feedback: 5 input DMAs total instead of 12+)
    w_slab = jnp.concatenate([w0, w1, wc1], axis=0)                       # (in+2H, H)
    v_slab = jnp.concatenate(
        [as0, ad0, b0, as1, ad1, b1, cb1, wc2.T,
         jnp.broadcast_to(cb2, (1, hidden_dim))], axis=0)                 # (9, H)

    # graph data: two graphs of 16 nodes each, edges kept inside each graph
    state_wf = jax.random.normal(keys[8], (N, in_dim), jnp.float32)
    half = N // 2
    src0 = jax.random.randint(keys[9], (E // 2,), 0, half)
    tgt0 = jax.random.randint(keys[10], (E // 2,), 0, half)
    src1 = jax.random.randint(keys[11], (E // 2,), half, N)
    tgt1 = jax.random.randint(keys[12], (E // 2,), half, N)
    edge_index_wf = jnp.stack([jnp.concatenate([src0, src1]),
                               jnp.concatenate([tgt0, tgt1])]).astype(jnp.int32)
    batch_wf = (jnp.arange(N) // half).astype(jnp.int32)
    mask_wf = jax.random.bernoulli(keys[13], 0.7, (N,))
    mask_wf = mask_wf.at[0].set(True).at[half].set(True)    # >=1 masked node per graph
    mask_batch = jnp.stack([mask_wf.astype(jnp.int32), batch_wf], axis=0)  # (2, N)

    values = critic_forward(state_wf, edge_index_wf, mask_batch, w_slab, v_slab,
                            batch_size=B)
    jax.block_until_ready(values)

    # ------------------- pure-JAX reference (same math) -------------------
    def reference(x, ei, mask, batch):
        ei_sym = jnp.concatenate([ei, ei[::-1]], axis=1)
        s_idx, t_idx = ei_sym[0], ei_sym[1]
        adj = jnp.zeros((N, N), jnp.float32).at[t_idx, s_idx].add(1.0)
        eye = jnp.eye(N, dtype=jnp.float32)
        adj = adj * (1.0 - eye) + eye

        def gat(h, w, a_s, a_d, b):
            xw = h @ w
            s = xw @ a_s[0]
            d = xw @ a_d[0]
            e = d[:, None] + s[None, :]
            e = jnp.where(e > 0, e, LEAKY_SLOPE * e)
            em = jnp.where(adj > 0, e, NEG_BIG)
            m = em.max(axis=1, keepdims=True)
            num = adj * jnp.exp(em - m)
            out = (num @ xw) / num.sum(axis=1, keepdims=True) + b
            return jnp.where(out > 0, out, jnp.exp(jnp.minimum(out, 0.0)) - 1.0)

        h0 = gat(x, w0, as0, ad0, b0)
        h1 = gat(h0, w1, as1, ad1, b1)
        pool = ((jnp.arange(B)[:, None] == batch[None, :]) &
                mask[None, :]).astype(jnp.float32)
        pooled = (pool @ h1) / jnp.maximum(pool.sum(axis=1, keepdims=True), 1.0)
        hid = jnp.maximum(pooled @ wc1 + cb1, 0.0)
        return (hid @ wc2 + cb2)[:, 0]

    ref = reference(state_wf, edge_index_wf, mask_wf, batch_wf)

    assert values.shape == (B,)
    assert bool(jnp.all(jnp.isfinite(values)))
    assert bool(jnp.max(jnp.abs(values - ref)) < 5e-2), (values, ref)
    print("KERNEL_OK")
</pallas_src>

<mosaic_0001>
module attributes {stable_mosaic.version = 11 : i64} {
  func.func @fused_critic_kernel(%arg0: memref<32x8xf32, #tpu.memory_space<vmem>>, %arg1: memref<2x48xi32, #tpu.memory_space<vmem>>, %arg2: memref<2x32xi32, #tpu.memory_space<vmem>>, %arg3: memref<72x32xf32, #tpu.memory_space<vmem>>, %arg4: memref<9x32xf32, #tpu.memory_space<vmem>>, %arg5: memref<2x1xf32, #tpu.memory_space<vmem>>) attributes {dimension_semantics = [], scalar_prefetch = 0 : i64, scratch_operands = 0 : i64, tpu.core_type = #tpu.core_type<tc>} {
    %c0 = arith.constant 0 : index
    %c0_0 = arith.constant 0 : index
    %0 = vector.load %arg0[%c0, %c0_0] : memref<32x8xf32, #tpu.memory_space<vmem>>, vector<32x8xf32>
    %1 = tpu.iota {dimensions = array<i32: 0>} : vector<32x48xi32>
    %c0_1 = arith.constant 0 : index
    %c0_2 = arith.constant 0 : index
    %2 = vector.load %arg1[%c0_1, %c0_2] : memref<2x48xi32, #tpu.memory_space<vmem>>, vector<1x48xi32>
    %c1 = arith.constant 1 : index
    %c0_3 = arith.constant 0 : index
    %3 = vector.load %arg1[%c1, %c0_3] : memref<2x48xi32, #tpu.memory_space<vmem>>, vector<1x48xi32>
    %4 = vector.broadcast %2 : vector<1x48xi32> to vector<32x48xi32>
    %5 = arith.cmpi eq, %1, %4 : vector<32x48xi32>
    %cst = arith.constant 1.000000e+00 : f32
    %cst_4 = arith.constant 0.000000e+00 : f32
    %6 = vector.broadcast %cst : f32 to vector<32x48xf32>
    %7 = vector.broadcast %cst_4 : f32 to vector<32x48xf32>
    %8 = arith.select %5, %6, %7 : vector<32x48xi1>, vector<32x48xf32>
    %9 = arith.truncf %8 : vector<32x48xf32> to vector<32x48xbf16>
    %10 = vector.broadcast %3 : vector<1x48xi32> to vector<32x48xi32>
    %11 = arith.cmpi eq, %1, %10 : vector<32x48xi32>
    %cst_5 = arith.constant 1.000000e+00 : f32
    %cst_6 = arith.constant 0.000000e+00 : f32
    %12 = vector.broadcast %cst_5 : f32 to vector<32x48xf32>
    %13 = vector.broadcast %cst_6 : f32 to vector<32x48xf32>
    %14 = arith.select %11, %12, %13 : vector<32x48xi1>, vector<32x48xf32>
    %15 = arith.truncf %14 : vector<32x48xf32> to vector<32x48xbf16>
    %16 = tpu.concatenate %15, %9 in 1 : vector<32x48xbf16>, vector<32x48xbf16> -> vector<32x96xbf16>
    %17 = tpu.concatenate %9, %15 in 1 : vector<32x48xbf16>, vector<32x48xbf16> -> vector<32x96xbf16>
    %cst_7 = arith.constant dense<0.000000e+00> : vector<32x32xf32>
    %18 = tpu.matmul %16, %17, %cst_7 {dimension_numbers = #tpu.dot_dimension_numbers<[1], [1], [0], [0], [0, 0, 1, 0], [], []>} : vector<32x96xbf16>, vector<32x96xbf16>, vector<32x32xf32> -> vector<32x32xf32>
    %19 = tpu.iota {dimensions = array<i32: 0>} : vector<32x32xi32>
    %20 = tpu.iota {dimensions = array<i32: 1>} : vector<32x32xi32>
    %21 = arith.cmpi eq, %19, %20 : vector<32x32xi32>
    %cst_8 = arith.constant 1.000000e+00 : f32
    %cst_9 = arith.constant 0.000000e+00 : f32
    %22 = vector.broadcast %cst_8 : f32 to vector<32x32xf32>
    %23 = vector.broadcast %cst_9 : f32 to vector<32x32xf32>
    %24 = arith.select %21, %22, %23 : vector<32x32xi1>, vector<32x32xf32>
    %cst_10 = arith.constant 1.000000e+00 : f32
    %25 = vector.broadcast %cst_10 : f32 to vector<32x32xf32>
    %26 = arith.subf %25, %24 : vector<32x32xf32>
    %27 = arith.mulf %18, %26 : vector<32x32xf32>
    %28 = arith.addf %27, %24 : vector<32x32xf32>
    %c0_11 = arith.constant 0 : index
    %c0_12 = arith.constant 0 : index
    %29 = vector.load %arg3[%c0_11, %c0_12] : memref<72x32xf32, #tpu.memory_space<vmem>>, vector<8x32xf32>
    %c8 = arith.constant 8 : index
    %c0_13 = arith.constant 0 : index
    %30 = vector.load %arg3[%c8, %c0_13] : memref<72x32xf32, #tpu.memory_space<vmem>>, vector<32x32xf32>
    %c40 = arith.constant 40 : index
    %c0_14 = arith.constant 0 : index
    %31 = vector.load %arg3[%c40, %c0_14] : memref<72x32xf32, #tpu.memory_space<vmem>>, vector<32x32xf32>
    %c0_15 = arith.constant 0 : index
    %c0_16 = arith.constant 0 : index
    %32 = vector.load %arg4[%c0_15, %c0_16] : memref<9x32xf32, #tpu.memory_space<vmem>>, vector<1x32xf32>
    %c1_17 = arith.constant 1 : index
    %c0_18 = arith.constant 0 : index
    %33 = vector.load %arg4[%c1_17, %c0_18] : memref<9x32xf32, #tpu.memory_space<vmem>>, vector<1x32xf32>
    %c2 = arith.constant 2 : index
    %c0_19 = arith.constant 0 : index
    %34 = vector.load %arg4[%c2, %c0_19] : memref<9x32xf32, #tpu.memory_space<vmem>>, vector<1x32xf32>
    %c3 = arith.constant 3 : index
    %c0_20 = arith.constant 0 : index
    %35 = vector.load %arg4[%c3, %c0_20] : memref<9x32xf32, #tpu.memory_space<vmem>>, vector<1x32xf32>
    %c4 = arith.constant 4 : index
    %c0_21 = arith.constant 0 : index
    %36 = vector.load %arg4[%c4, %c0_21] : memref<9x32xf32, #tpu.memory_space<vmem>>, vector<1x32xf32>
    %c5 = arith.constant 5 : index
    %c0_22 = arith.constant 0 : index
    %37 = vector.load %arg4[%c5, %c0_22] : memref<9x32xf32, #tpu.memory_space<vmem>>, vector<1x32xf32>
    %c6 = arith.constant 6 : index
    %c0_23 = arith.constant 0 : index
    %38 = vector.load %arg4[%c6, %c0_23] : memref<9x32xf32, #tpu.memory_space<vmem>>, vector<1x32xf32>
    %c7 = arith.constant 7 : index
    %c0_24 = arith.constant 0 : index
    %39 = vector.load %arg4[%c7, %c0_24] : memref<9x32xf32, #tpu.memory_space<vmem>>, vector<1x32xf32>
    %c8_25 = arith.constant 8 : index
    %c0_26 = arith.constant 0 : index
    %40 = vector.load %arg4[%c8_25, %c0_26] : memref<9x32xf32, #tpu.memory_space<vmem>>, vector<1x1xf32>
    %cst_27 = arith.constant dense<0.000000e+00> : vector<32x32xf32>
    %41 = tpu.matmul %0, %29, %cst_27 {dimension_numbers = #tpu.dot_dimension_numbers<[1], [0], [0], [1], [0, 0, 1, 1], [], []>} : vector<32x8xf32>, vector<8x32xf32>, vector<32x32xf32> -> vector<32x32xf32>
    %42 = vector.broadcast %32 : vector<1x32xf32> to vector<32x32xf32>
    %43 = arith.mulf %41, %42 : vector<32x32xf32>
    %cst_28 = arith.constant dense<0.000000e+00> : vector<32xf32>
    %44 = vector.multi_reduction <add>, %43, %cst_28 [1] : vector<32x32xf32> to vector<32xf32>
    %45 = vector.shape_cast %44 : vector<32xf32> to vector<32x1xf32>
    %46 = vector.broadcast %33 : vector<1x32xf32> to vector<32x32xf32>
    %47 = arith.mulf %41, %46 : vector<32x32xf32>
    %cst_29 = arith.constant dense<0.000000e+00> : vector<32xf32>
    %48 = vector.multi_reduction <add>, %47, %cst_29 [1] : vector<32x32xf32> to vector<32xf32>
    %49 = vector.shape_cast %48 : vector<32xf32> to vector<32x1xf32>
    %50 = tpu.transpose %45, [1, 0] : vector<32x1xf32> -> vector<1x32xf32>
    %51 = vector.broadcast %49 : vector<32x1xf32> to vector<32x32xf32>
    %52 = vector.broadcast %50 : vector<1x32xf32> to vector<32x32xf32>
    %53 = arith.addf %51, %52 : vector<32x32xf32>
    %cst_30 = arith.constant 0.000000e+00 : f32
    %54 = vector.broadcast %cst_30 : f32 to vector<32x32xf32>
    %55 = arith.cmpf ogt, %53, %54 : vector<32x32xf32>
    %cst_31 = arith.constant 2.000000e-01 : f32
    %56 = vector.broadcast %cst_31 : f32 to vector<32x32xf32>
    %57 = arith.mulf %56, %53 : vector<32x32xf32>
    %58 = arith.select %55, %53, %57 : vector<32x32xi1>, vector<32x32xf32>
    %cst_32 = arith.constant 0.000000e+00 : f32
    %59 = vector.broadcast %cst_32 : f32 to vector<32x32xf32>
    %60 = arith.cmpf ogt, %28, %59 : vector<32x32xf32>
    %cst_33 = arith.constant -1.000000e+30 : f32
    %61 = vector.broadcast %cst_33 : f32 to vector<32x32xf32>
    %62 = arith.select %60, %58, %61 : vector<32x32xi1>, vector<32x32xf32>
    %cst_34 = arith.constant dense<0xFF800000> : vector<32xf32>
    %63 = vector.multi_reduction <maximumf>, %62, %cst_34 [1] : vector<32x32xf32> to vector<32xf32>
    %64 = vector.shape_cast %63 : vector<32xf32> to vector<32x1xf32>
    %65 = vector.broadcast %64 : vector<32x1xf32> to vector<32x32xf32>
    %66 = arith.subf %62, %65 : vector<32x32xf32>
    %67 = math.exp %66 : vector<32x32xf32>
    %68 = arith.mulf %28, %67 : vector<32x32xf32>
    %cst_35 = arith.constant dense<0.000000e+00> : vector<32xf32>
    %69 = vector.multi_reduction <add>, %68, %cst_35 [1] : vector<32x32xf32> to vector<32xf32>
    %70 = vector.shape_cast %69 : vector<32xf32> to vector<32x1xf32>
    %cst_36 = arith.constant dense<0.000000e+00> : vector<32x32xf32>
    %71 = tpu.matmul %68, %41, %cst_36 {dimension_numbers = #tpu.dot_dimension_numbers<[1], [0], [0], [1], [0, 0, 1, 1], [], []>} : vector<32x32xf32>, vector<32x32xf32>, vector<32x32xf32> -> vector<32x32xf32>
    %72 = vector.broadcast %70 : vector<32x1xf32> to vector<32x32xf32>
    %73 = arith.divf %71, %72 : vector<32x32xf32>
    %74 = vector.broadcast %34 : vector<1x32xf32> to vector<32x32xf32>
    %75 = arith.addf %73, %74 : vector<32x32xf32>
    %cst_37 = arith.constant 0.000000e+00 : f32
    %76 = vector.broadcast %cst_37 : f32 to vector<32x32xf32>
    %77 = arith.cmpf ogt, %75, %76 : vector<32x32xf32>
    %cst_38 = arith.constant 0.000000e+00 : f32
    %78 = vector.broadcast %cst_38 : f32 to vector<32x32xf32>
    %79 = arith.minimumf %75, %78 : vector<32x32xf32>
    %80 = math.exp %79 : vector<32x32xf32>
    %cst_39 = arith.constant 1.000000e+00 : f32
    %81 = vector.broadcast %cst_39 : f32 to vector<32x32xf32>
    %82 = arith.subf %80, %81 : vector<32x32xf32>
    %83 = arith.select %77, %75, %82 : vector<32x32xi1>, vector<32x32xf32>
    %cst_40 = arith.constant dense<0.000000e+00> : vector<32x32xf32>
    %84 = tpu.matmul %83, %30, %cst_40 {dimension_numbers = #tpu.dot_dimension_numbers<[1], [0], [0], [1], [0, 0, 1, 1], [], []>} : vector<32x32xf32>, vector<32x32xf32>, vector<32x32xf32> -> vector<32x32xf32>
    %85 = vector.broadcast %35 : vector<1x32xf32> to vector<32x32xf32>
    %86 = arith.mulf %84, %85 : vector<32x32xf32>
    %cst_41 = arith.constant dense<0.000000e+00> : vector<32xf32>
    %87 = vector.multi_reduction <add>, %86, %cst_41 [1] : vector<32x32xf32> to vector<32xf32>
    %88 = vector.shape_cast %87 : vector<32xf32> to vector<32x1xf32>
    %89 = vector.broadcast %36 : vector<1x32xf32> to vector<32x32xf32>
    %90 = arith.mulf %84, %89 : vector<32x32xf32>
    %cst_42 = arith.constant dense<0.000000e+00> : vector<32xf32>
    %91 = vector.multi_reduction <add>, %90, %cst_42 [1] : vector<32x32xf32> to vector<32xf32>
    %92 = vector.shape_cast %91 : vector<32xf32> to vector<32x1xf32>
    %93 = tpu.transpose %88, [1, 0] : vector<32x1xf32> -> vector<1x32xf32>
    %94 = vector.broadcast %92 : vector<32x1xf32> to vector<32x32xf32>
    %95 = vector.broadcast %93 : vector<1x32xf32> to vector<32x32xf32>
    %96 = arith.addf %94, %95 : vector<32x32xf32>
    %cst_43 = arith.constant 0.000000e+00 : f32
    %97 = vector.broadcast %cst_43 : f32 to vector<32x32xf32>
    %98 = arith.cmpf ogt, %96, %97 : vector<32x32xf32>
    %cst_44 = arith.constant 2.000000e-01 : f32
    %99 = vector.broadcast %cst_44 : f32 to vector<32x32xf32>
    %100 = arith.mulf %99, %96 : vector<32x32xf32>
    %101 = arith.select %98, %96, %100 : vector<32x32xi1>, vector<32x32xf32>
    %cst_45 = arith.constant 0.000000e+00 : f32
    %102 = vector.broadcast %cst_45 : f32 to vector<32x32xf32>
    %103 = arith.cmpf ogt, %28, %102 : vector<32x32xf32>
    %cst_46 = arith.constant -1.000000e+30 : f32
    %104 = vector.broadcast %cst_46 : f32 to vector<32x32xf32>
    %105 = arith.select %103, %101, %104 : vector<32x32xi1>, vector<32x32xf32>
    %cst_47 = arith.constant dense<0xFF800000> : vector<32xf32>
    %106 = vector.multi_reduction <maximumf>, %105, %cst_47 [1] : vector<32x32xf32> to vector<32xf32>
    %107 = vector.shape_cast %106 : vector<32xf32> to vector<32x1xf32>
    %108 = vector.broadcast %107 : vector<32x1xf32> to vector<32x32xf32>
    %109 = arith.subf %105, %108 : vector<32x32xf32>
    %110 = math.exp %109 : vector<32x32xf32>
    %111 = arith.mulf %28, %110 : vector<32x32xf32>
    %cst_48 = arith.constant dense<0.000000e+00> : vector<32xf32>
    %112 = vector.multi_reduction <add>, %111, %cst_48 [1] : vector<32x32xf32> to vector<32xf32>
    %113 = vector.shape_cast %112 : vector<32xf32> to vector<32x1xf32>
    %cst_49 = arith.constant dense<0.000000e+00> : vector<32x32xf32>
    %114 = tpu.matmul %111, %84, %cst_49 {dimension_numbers = #tpu.dot_dimension_numbers<[1], [0], [0], [1], [0, 0, 1, 1], [], []>} : vector<32x32xf32>, vector<32x32xf32>, vector<32x32xf32> -> vector<32x32xf32>
    %115 = vector.broadcast %113 : vector<32x1xf32> to vector<32x32xf32>
    %116 = arith.divf %114, %115 : vector<32x32xf32>
    %117 = vector.broadcast %37 : vector<1x32xf32> to vector<32x32xf32>
    %118 = arith.addf %116, %117 : vector<32x32xf32>
    %cst_50 = arith.constant 0.000000e+00 : f32
    %119 = vector.broadcast %cst_50 : f32 to vector<32x32xf32>
    %120 = arith.cmpf ogt, %118, %119 : vector<32x32xf32>
    %cst_51 = arith.constant 0.000000e+00 : f32
    %121 = vector.broadcast %cst_51 : f32 to vector<32x32xf32>
    %122 = arith.minimumf %118, %121 : vector<32x32xf32>
    %123 = math.exp %122 : vector<32x32xf32>
    %cst_52 = arith.constant 1.000000e+00 : f32
    %124 = vector.broadcast %cst_52 : f32 to vector<32x32xf32>
    %125 = arith.subf %123, %124 : vector<32x32xf32>
    %126 = arith.select %120, %118, %125 : vector<32x32xi1>, vector<32x32xf32>
    %c0_53 = arith.constant 0 : index
    %c0_54 = arith.constant 0 : index
    %127 = vector.load %arg2[%c0_53, %c0_54] : memref<2x32xi32, #tpu.memory_space<vmem>>, vector<1x32xi32>
    %c1_55 = arith.constant 1 : index
    %c0_56 = arith.constant 0 : index
    %128 = vector.load %arg2[%c1_55, %c0_56] : memref<2x32xi32, #tpu.memory_space<vmem>>, vector<1x32xi32>
    %129 = tpu.iota {dimensions = array<i32: 0>} : vector<2x32xi32>
    %130 = vector.broadcast %128 : vector<1x32xi32> to vector<2x32xi32>
    %131 = arith.cmpi eq, %129, %130 : vector<2x32xi32>
    %c0_i32 = arith.constant 0 : i32
    %132 = vector.broadcast %c0_i32 : i32 to vector<1x32xi32>
    %133 = arith.cmpi sgt, %127, %132 : vector<1x32xi32>
    %134 = vector.broadcast %133 : vector<1x32xi1> to vector<2x32xi1>
    %135 = arith.andi %131, %134 : vector<2x32xi1>
    %cst_57 = arith.constant 1.000000e+00 : f32
    %cst_58 = arith.constant 0.000000e+00 : f32
    %136 = vector.broadcast %cst_57 : f32 to vector<2x32xf32>
    %137 = vector.broadcast %cst_58 : f32 to vector<2x32xf32>
    %138 = arith.select %135, %136, %137 : vector<2x32xi1>, vector<2x32xf32>
    %cst_59 = arith.constant dense<0.000000e+00> : vector<2xf32>
    %139 = vector.multi_reduction <add>, %138, %cst_59 [1] : vector<2x32xf32> to vector<2xf32>
    %140 = vector.shape_cast %139 : vector<2xf32> to vector<2x1xf32>
    %cst_60 = arith.constant dense<0.000000e+00> : vector<2x32xf32>
    %141 = tpu.matmul %138, %126, %cst_60 {dimension_numbers = #tpu.dot_dimension_numbers<[1], [0], [0], [1], [0, 0, 1, 1], [], []>} : vector<2x32xf32>, vector<32x32xf32>, vector<2x32xf32> -> vector<2x32xf32>
    %cst_61 = arith.constant 1.000000e+00 : f32
    %142 = vector.broadcast %cst_61 : f32 to vector<2x1xf32>
    %143 = arith.maximumf %140, %142 : vector<2x1xf32>
    %144 = vector.broadcast %143 : vector<2x1xf32> to vector<2x32xf32>
    %145 = arith.divf %141, %144 : vector<2x32xf32>
    %cst_62 = arith.constant dense<0.000000e+00> : vector<2x32xf32>
    %146 = tpu.matmul %145, %31, %cst_62 {dimension_numbers = #tpu.dot_dimension_numbers<[1], [0], [0], [1], [0, 0, 1, 1], [], []>} : vector<2x32xf32>, vector<32x32xf32>, vector<2x32xf32> -> vector<2x32xf32>
    %147 = vector.broadcast %38 : vector<1x32xf32> to vector<2x32xf32>
    %148 = arith.addf %146, %147 : vector<2x32xf32>
    %cst_63 = arith.constant 0.000000e+00 : f32
    %149 = vector.broadcast %cst_63 : f32 to vector<2x32xf32>
    %150 = arith.maximumf %148, %149 : vector<2x32xf32>
    %151 = vector.broadcast %39 : vector<1x32xf32> to vector<2x32xf32>
    %152 = arith.mulf %150, %151 : vector<2x32xf32>
    %cst_64 = arith.constant dense<0.000000e+00> : vector<2xf32>
    %153 = vector.multi_reduction <add>, %152, %cst_64 [1] : vector<2x32xf32> to vector<2xf32>
    %154 = vector.shape_cast %153 : vector<2xf32> to vector<2x1xf32>
    %155 = vector.broadcast %40 : vector<1x1xf32> to vector<2x1xf32>
    %156 = arith.addf %154, %155 : vector<2x1xf32>
    %c0_65 = arith.constant 0 : index
    %c0_66 = arith.constant 0 : index
    %157 = vector.load %arg5[%c0_65, %c0_66] : memref<2x1xf32, #tpu.memory_space<vmem>>, vector<2x1xf32>
    tpu.vector_store %arg5[%c0_65, %c0_66], %156 {strides = array<i32>} : memref<2x1xf32, #tpu.memory_space<vmem>>, vector<2x1xf32>,
    return
  }
}

</mosaic_0001>

<llo_original>
// kernel: critic_forward.1
$region0: #{critic_forward.1}
  #allocation0 [shape = 'u32[]', space=smem, size = 0x4, offset = 0x4, fixed_abs, tag = 'smem constant byte address 0x4 - core index']
  #allocation1 [shape = 'u32[144,128]{1,0:T(1,128)}', space=vmem, size = 0x12000, scoped, tag = 'internal scratch']
  %s0 = inlined_call_operand.vmem [shape: f32[32,8], index: 0, kind: input, shape index: {}]
  %s1 = inlined_call_operand.vmem [shape: s32[2,48], index: 1, kind: input, shape index: {}]
  %s2 = inlined_call_operand.vmem [shape: s32[2,32], index: 2, kind: input, shape index: {}]
  %s3 = inlined_call_operand.vmem [shape: f32[72,32], index: 3, kind: input, shape index: {}]
  %s4 = inlined_call_operand.vmem [shape: f32[9,32], index: 4, kind: input, shape index: {}]
  %s5 = inlined_call_operand.vmem [shape: f32[2,1], index: 5, kind: output, shape index: {}]
  %s6 = sld [smem:[#allocation0]]
  $region30: #{critic_forward.1} parent=0
    _
  %s8 = ssub.s32 1, %s6
  %s9 = scalar_select 0, %s8, %s6
  // Predicated region
  $region2: #{critic_forward.1} parent=0 // pred_check
    _
  $region3: #{critic_forward.1} parent=0 // pred_check_branch
    %11 = sbr.rel (0) target = $region5
  $region4: #{critic_forward.1} parent=0 // pred_region
    _
  $region5: #{critic_forward.1} parent=0 // pred_fallthru
    _
  // Predicated region
  $region6: #{critic_forward.1} parent=0 // pred_check
    _
  $region7: #{critic_forward.1} parent=0 // pred_check_branch
    %13 = sbr.rel (0) target = $region9
  $region8: #{critic_forward.1} parent=0 // pred_region
    _
  $region9: #{critic_forward.1} parent=0 // pred_fallthru
    _
  // Predicated region
  $region10: #{critic_forward.1} parent=0 // pred_check
    _
  $region11: #{critic_forward.1} parent=0 // pred_check_branch
    %15 = sbr.rel (0) target = $region13
  $region12: #{critic_forward.1} parent=0 // pred_region
    _
  $region13: #{critic_forward.1} parent=0 // pred_fallthru
    _
  // Predicated region
  $region14: #{critic_forward.1} parent=0 // pred_check
    _
  $region15: #{critic_forward.1} parent=0 // pred_check_branch
    %17 = sbr.rel (0) target = $region17
  $region16: #{critic_forward.1} parent=0 // pred_region
    _
  $region17: #{critic_forward.1} parent=0 // pred_fallthru
    _
  // Predicated region
  $region18: #{critic_forward.1} parent=0 // pred_check
    _
  $region19: #{critic_forward.1} parent=0 // pred_check_branch
    %19 = sbr.rel (0) target = $region21
  $region20: #{critic_forward.1} parent=0 // pred_region
    _
  $region21: #{critic_forward.1} parent=0 // pred_fallthru
    _
  %v21 = vld [vmem:[%s0] sm:$0xff]
  %v22 = vld [vmem:[%s0 + $0x8] sm:$0xff]
  %v23 = vld [vmem:[%s0 + $0x10] sm:$0xff]
  %v24 = vld [vmem:[%s0 + $0x18] sm:$0xff]
  %v25 = vlaneseq
  %v26 = vshrl.u32 %v25, 7
  %v27 = vadd.s32 %v26, 8
  %v28 = vadd.s32 %v26, 16
  %v29 = vadd.s32 %v26, 24
  %v30 = vld [vmem:[%s1] sm:$0x1]
  %v31 = vld [vmem:[%s1 + $0x1] sm:$0x1]
  %v32 = vlaneseq
  %v33 = vshrl.u32 %v32, 7
  %v34 = vsub.s32 0, %v33
  %v35 = vrot.slane %v30, %v34
  %vm36 = vcmp.eq.s32.totalorder %v26, %v35
  %vm37 = vcmp.eq.s32.totalorder %v27, %v35
  %vm38 = vcmp.eq.s32.totalorder %v28, %v35
  %vm39 = vcmp.eq.s32.totalorder %v29, %v35
  %v40 = vsel %vm36, 1.0, 0.0
  %v41 = vsel %vm37, 1.0, 0.0
  %v42 = vsel %vm38, 1.0, 0.0
  %v43 = vsel %vm39, 1.0, 0.0
  %v44 = vpack.c.bf16 %v41, %v40
  %v45 = vpack.c.bf16 %v43, %v42
  %v46 = vlaneseq
  %v47 = vshrl.u32 %v46, 7
  %v48 = vsub.s32 0, %v47
  %v49 = vrot.slane %v31, %v48
  %vm50 = vcmp.eq.s32.totalorder %v26, %v49
  %vm51 = vcmp.eq.s32.totalorder %v27, %v49
  %vm52 = vcmp.eq.s32.totalorder %v28, %v49
  %vm53 = vcmp.eq.s32.totalorder %v29, %v49
  %v54 = vsel %vm50, 1.0, 0.0
  %v55 = vsel %vm51, 1.0, 0.0
  %v56 = vsel %vm52, 1.0, 0.0
  %v57 = vsel %vm53, 1.0, 0.0
  %v58 = vpack.c.bf16 %v55, %v54
  %v59 = vpack.c.bf16 %v57, %v56
  %62 = vrot.lane.b32.xlu0 %v44, 48
  %v63 = vpop.permute.xlu0 %62
  %64 = vrot.lane.b32.xlu0 %v45, 48
  %v65 = vpop.permute.xlu0 %64
  %vm66 = vcmask 392192
  %v69 = vsel %vm66, %v58, %v63
  %v72 = vsel %vm66, %v59, %v65
  %75 = vrot.lane.b32.xlu0 %v58, 48
  %v76 = vpop.permute.xlu0 %75
  %77 = vrot.lane.b32.xlu0 %v59, 48
  %v78 = vpop.permute.xlu0 %77
  %v81 = vsel %vm66, %v44, %v76
  %v84 = vsel %vm66, %v45, %v78
  %vm85 = vcmask 785408
  %v86 = vsel %vm85, %v69, 0
  %v88 = vsel %vm85, %v72, 0
  %v90 = vsel %vm85, %v81, 0
  %v92 = vsel %vm85, %v84, 0
  %94 = vmatprep.subr.bf16.mxu0 0
  %95 = vmatpush1.bf16.xpose.msra.mxu0 0
  %96 = vmatprep.subr.bf16.mxu0 0
  %97 = vmatpush1.bf16.xpose.msra.mxu0 0
  %98 = vmatprep.subr.bf16.mxu0 0
  %99 = vmatpush1.bf16.xpose.msra.mxu0 0
  %100 = vmatprep.subr.bf16.mxu0 0
  %101 = vmatpush1.bf16.xpose.msra.mxu0 0
  %102 = vmatprep.subr.bf16.mxu0 0
  %103 = vmatpush1.bf16.xpose.msra.mxu0 0
  %104 = vmatprep.subr.bf16.mxu0 0
  %105 = vmatpush1.bf16.xpose.msra.mxu0 0
  %106 = vmatprep.subr.bf16.mxu0 0
  %107 = vmatpush1.bf16.xpose.msra.mxu0 %v92
  %108 = vmatprep.subr.bf16.mxu0 0
  %109 = vmatpush1.bf16.xpose.msra.mxu0 %v90
  %110 = vmatprep.subr.bf16.mxu0 0
  %111 = vmatpush2.bf16.xpose.msra.mxu0 0
  %112 = vmatprep.subr.bf16.mxu0 0
  %113 = vmatpush2.bf16.xpose.msra.mxu0 0
  %114 = vmatprep.subr.bf16.mxu0 0
  %115 = vmatpush2.bf16.xpose.msra.mxu0 0
  %116 = vmatprep.subr.bf16.mxu0 0
  %117 = vmatpush2.bf16.xpose.msra.mxu0 0
  %118 = vmatprep.subr.bf16.mxu0 0
  %119 = vmatpush2.bf16.xpose.msra.mxu0 0
  %120 = vmatprep.subr.bf16.mxu0 0
  %121 = vmatpush2.bf16.xpose.msra.mxu0 0
  %122 = vmatprep.subr.bf16.mxu0 0
  %123 = vmatpush2.bf16.xpose.msra.mxu0 0
  %124 = vmatprep.subr.bf16.mxu0 0
  %125 = vmatpush2.bf16.xpose.msra.mxu0 0
  %126 = vmatprep.mubr.bf16.mxu0 0
  %127 = vmatmul.mubr.bf16.gmra.mxu0 %v86
  %v128 = vpop.f32.mrf.mxu0
  %v129 = vadd.f32 0.0, %v128
  %v130 = vpop.f32.mrf.mxu0
  %v131 = vpop.f32.mrf.mxu0
  %v132 = vadd.f32 0.0, %v131
  %v133 = vpop.f32.mrf.mxu0
  %134 = vmatprep.mubr.bf16.mxu0 0
  %135 = vmatmul.mubr.bf16.gmra.mxu0 %v88
  %v136 = vpop.f32.mrf.mxu0
  %v137 = vadd.f32 0.0, %v136
  %v138 = vpop.f32.mrf.mxu0
  %v139 = vpop.f32.mrf.mxu0
  %v140 = vadd.f32 0.0, %v139
  %v141 = vpop.f32.mrf.mxu0
  %142 = vdwg.mxu0
  %v143 = vlaneseq
  %v144 = vand.u32 %v143, 127
  %vm145 = vcmp.eq.s32.totalorder %v26, %v144
  %vm146 = vcmp.eq.s32.totalorder %v27, %v144
  %vm147 = vcmp.eq.s32.totalorder %v28, %v144
  %vm148 = vcmp.eq.s32.totalorder %v29, %v144
  %v149 = vsel %vm145, 1.0, 0.0
  %v150 = vsel %vm146, 1.0, 0.0
  %v151 = vsel %vm147, 1.0, 0.0
  %v152 = vsel %vm148, 1.0, 0.0
  %v153 = vsub.f32 1.0, %v149
  %v154 = vsub.f32 1.0, %v150
  %v155 = vsub.f32 1.0, %v151
  %v156 = vsub.f32 1.0, %v152
  %v157 = vmul.f32 %v129, %v153
  %v158 = vmul.f32 %v132, %v154
  %v159 = vmul.f32 %v137, %v155
  %v160 = vmul.f32 %v140, %v156
  %v161 = vadd.f32 %v157, %v149
  %v162 = vadd.f32 %v158, %v150
  %v163 = vadd.f32 %v159, %v151
  %v164 = vadd.f32 %v160, %v152
  %v165 = vld [vmem:[%s3] sm:$0xff]
  %v166 = vld [vmem:[%s3 + $0x8] sm:$0xff]
  %v167 = vld [vmem:[%s3 + $0x10] sm:$0xff]
  %v168 = vld [vmem:[%s3 + $0x18] sm:$0xff]
  %v169 = vld [vmem:[%s3 + $0x20] sm:$0xff]
  %v170 = vld [vmem:[%s3 + $0x28] sm:$0xff]
  %v171 = vld [vmem:[%s3 + $0x30] sm:$0xff]
  %v172 = vld [vmem:[%s3 + $0x38] sm:$0xff]
  %v173 = vld [vmem:[%s3 + $0x40] sm:$0xff]
  %v174 = vld [vmem:[%s4] sm:$0x1]
  %v175 = vld [vmem:[%s4 + $0x1] sm:$0x1]
  %v176 = vld [vmem:[%s4 + $0x2] sm:$0x1]
  %v177 = vld [vmem:[%s4 + $0x3] sm:$0x1]
  %v178 = vld [vmem:[%s4 + $0x4] sm:$0x1]
  %v179 = vld [vmem:[%s4 + $0x5] sm:$0x1]
  %v180 = vld [vmem:[%s4 + $0x6] sm:$0x1]
  %v181 = vld [vmem:[%s4 + $0x7] sm:$0x1]
  %v182 = vld [vmem:[%s4 + $0x8] sm:$0x1]
  %vm183 = vcmask 64512
  %v185 = vsel %vm183, %v21, 0
  %v188 = vsel %vm183, %v22, 0
  %v191 = vsel %vm183, %v23, 0
  %v194 = vsel %vm183, %v24, 0
  %196 = vmatprep.subr.mxu0 0.0
  %197 = vmatpush1.msra.mxu0 0.0
  %198 = vmatprep.subr.mxu0 0.0
  %199 = vmatpush1.msra.mxu0 0.0
  %200 = vmatprep.subr.mxu0 0.0
  %201 = vmatpush1.msra.mxu0 0.0
  %202 = vmatprep.subr.mxu0 0.0
  %203 = vmatpush1.msra.mxu0 0.0
  %204 = vmatprep.subr.mxu0 0.0
  %205 = vmatpush1.msra.mxu0 0.0
  %206 = vmatprep.subr.mxu0 0.0
  %207 = vmatpush1.msra.mxu0 0.0
  %208 = vmatprep.subr.mxu0 0.0
  %209 = vmatpush1.msra.mxu0 0.0
  %210 = vmatprep.subr.mxu0 0.0
  %211 = vmatpush1.msra.mxu0 0.0
  %212 = vmatprep.subr.mxu0 0.0
  %213 = vmatpush1.msra.mxu0 0.0
  %214 = vmatprep.subr.mxu0 0.0
  %215 = vmatpush1.msra.mxu0 0.0
  %216 = vmatprep.subr.mxu0 0.0
  %217 = vmatpush1.msra.mxu0 0.0
  %218 = vmatprep.subr.mxu0 0.0
  %219 = vmatpush1.msra.mxu0 0.0
  %220 = vmatprep.subr.mxu0 0.0
  %221 = vmatpush1.msra.mxu0 0.0
  %222 = vmatprep.subr.mxu0 0.0
  %223 = vmatpush1.msra.mxu0 0.0
  %224 = vmatprep.subr.mxu0 0.0
  %225 = vmatpush1.msra.mxu0 0.0
  %226 = vmatprep.subr.mxu0 0.0
  %227 = vmatpush1.msra.mxu0 %v165
  %228 = vmatprep.subr.mxu0 0.0
  %229 = vmatpush2.msra.mxu0 0.0
  %230 = vmatprep.subr.mxu0 0.0
  %231 = vmatpush2.msra.mxu0 0.0
  %232 = vmatprep.subr.mxu0 0.0
  %233 = vmatpush2.msra.mxu0 0.0
  %234 = vmatprep.subr.mxu0 0.0
  %235 = vmatpush2.msra.mxu0 0.0
  %236 = vmatprep.subr.mxu0 0.0
  %237 = vmatpush2.msra.mxu0 0.0
  %238 = vmatprep.subr.mxu0 0.0
  %239 = vmatpush2.msra.mxu0 0.0
  %240 = vmatprep.subr.mxu0 0.0
  %241 = vmatpush2.msra.mxu0 0.0
  %242 = vmatprep.subr.mxu0 0.0
  %243 = vmatpush2.msra.mxu0 0.0
  %244 = vmatprep.subr.mxu0 0.0
  %245 = vmatpush2.msra.mxu0 0.0
  %246 = vmatprep.subr.mxu0 0.0
  %247 = vmatpush2.msra.mxu0 0.0
  %248 = vmatprep.subr.mxu0 0.0
  %249 = vmatpush2.msra.mxu0 0.0
  %250 = vmatprep.subr.mxu0 0.0
  %251 = vmatpush2.msra.mxu0 0.0
  %252 = vmatprep.subr.mxu0 0.0
  %253 = vmatpush2.msra.mxu0 0.0
  %254 = vmatprep.subr.mxu0 0.0
  %255 = vmatpush2.msra.mxu0 0.0
  %256 = vmatprep.subr.mxu0 0.0
  %257 = vmatpush2.msra.mxu0 0.0
  %258 = vmatprep.subr.mxu0 0.0
  %259 = vmatpush2.msra.mxu0 0.0
  %260 = vmatprep.mubr.f32.mxu0 0.0
  %261 = vmatmul.mubr.f32.gmra.mxu0 %v185
  %v262 = vpop.f32.mrf.mxu0
  %v263 = vadd.f32 0.0, %v262
  %v264 = vpop.f32.mrf.mxu0
  %265 = vmatprep.mubr.f32.mxu0 0.0
  %266 = vmatmul.mubr.f32.gmra.mxu0 %v188
  %v267 = vpop.f32.mrf.mxu0
  %v268 = vadd.f32 0.0, %v267
  %v269 = vpop.f32.mrf.mxu0
  %270 = vmatprep.mubr.f32.mxu0 0.0
  %271 = vmatmul.mubr.f32.gmra.mxu0 %v191
  %v272 = vpop.f32.mrf.mxu0
  %v273 = vadd.f32 0.0, %v272
  %v274 = vpop.f32.mrf.mxu0
  %275 = vmatprep.mubr.f32.mxu0 0.0
  %276 = vmatmul.mubr.f32.gmra.mxu0 %v194
  %v277 = vpop.f32.mrf.mxu0
  %v278 = vadd.f32 0.0, %v277
  %v279 = vpop.f32.mrf.mxu0
  %280 = vdwg.mxu0
  %v281 = vlaneseq
  %v282 = vshrl.u32 %v281, 7
  %v283 = vsub.s32 0, %v282
  %v284 = vrot.slane %v174, %v283
  %v285 = vmul.f32 %v263, %v284
  %v286 = vmul.f32 %v268, %v284
  %v287 = vmul.f32 %v273, %v284
  %v288 = vmul.f32 %v278, %v284
  %vm289 = vcmask 261120
  %v290 = vsel %vm289, %v285, 0.0
  %291 = vadd.xlane.f32.xlu0 %v290
  %v292 = vpop.xlane.xlu0 %291
  %v293 = vsel %vm289, %v286, 0.0
  %294 = vadd.xlane.f32.xlu0 %v293
  %v295 = vpop.xlane.xlu0 %294
  %v296 = vsel %vm289, %v287, 0.0
  %297 = vadd.xlane.f32.xlu0 %v296
  %v298 = vpop.xlane.xlu0 %297
  %v299 = vsel %vm289, %v288, 0.0
  %300 = vadd.xlane.f32.xlu0 %v299
  %v301 = vpop.xlane.xlu0 %300
  %v302 = vlaneseq
  %v303 = vshrl.u32 %v302, 7
  %v304 = vsub.s32 0, %v303
  %v305 = vrot.slane %v175, %v304
  %v306 = vmul.f32 %v263, %v305
  %v307 = vmul.f32 %v268, %v305
  %v308 = vmul.f32 %v273, %v305
  %v309 = vmul.f32 %v278, %v305
  %v310 = vsel %vm289, %v306, 0.0
  %311 = vadd.xlane.f32.xlu0 %v310
  %v312 = vpop.xlane.xlu0 %311
  %v313 = vsel %vm289, %v307, 0.0
  %314 = vadd.xlane.f32.xlu0 %v313
  %v315 = vpop.xlane.xlu0 %314
  %v316 = vsel %vm289, %v308, 0.0
  %317 = vadd.xlane.f32.xlu0 %v316
  %v318 = vpop.xlane.xlu0 %317
  %v319 = vsel %vm289, %v309, 0.0
  %320 = vadd.xlane.f32.xlu0 %v319
  %v321 = vpop.xlane.xlu0 %320
  %322 = vxpose.xlu0.b32.start [1/16] %v292, 128
  %323 = vxpose.xlu0.b32.cont [2/16] %v295, 128
  %324 = vxpose.xlu0.b32.cont [3/16] %v298, 128
  %325 = vxpose.xlu0.b32.cont [4/16] %v301, 128
  %326 = vxpose.xlu0.b32.cont [5/16] 0.0, 128
  %327 = vxpose.xlu0.b32.cont [6/16] 0.0, 128
  %328 = vxpose.xlu0.b32.cont [7/16] 0.0, 128
  %329 = vxpose.xlu0.b32.cont [8/16] 0.0, 128
  %330 = vxpose.xlu0.b32.cont [9/16] 0.0, 128
  %331 = vxpose.xlu0.b32.cont [10/16] 0.0, 128
  %332 = vxpose.xlu0.b32.cont [11/16] 0.0, 128
  %333 = vxpose.xlu0.b32.cont [12/16] 0.0, 128
  %334 = vxpose.xlu0.b32.cont [13/16] 0.0, 128
  %335 = vxpose.xlu0.b32.cont [14/16] 0.0, 128
  %336 = vxpose.xlu0.b32.cont [15/16] 0.0, 128
  %337 = vxpose.xlu0.b32.end [16/16] 0.0, 128
  %v338 = vpop.trf.xlu0
  %v339 = vpop.trf.xlu0
  %v340 = vpop.trf.xlu0
  %v341 = vpop.trf.xlu0
  %v342 = vpop.trf.xlu0
  %v343 = vpop.trf.xlu0
  %v344 = vpop.trf.xlu0
  %v345 = vpop.trf.xlu0
  %v346 = vpop.trf.xlu0
  %v347 = vpop.trf.xlu0
  %v348 = vpop.trf.xlu0
  %v349 = vpop.trf.xlu0
  %v350 = vpop.trf.xlu0
  %v351 = vpop.trf.xlu0
  %v352 = vpop.trf.xlu0
  %v353 = vpop.trf.xlu0
  %v354 = vlaneseq
  %v355 = vshrl.u32 %v354, 7
  %v356 = vsub.s32 0, %v355
  %v357 = vrot.slane %v338, %v356
  %v358 = vadd.f32 %v312, %v357
  %v359 = vadd.f32 %v315, %v357
  %v360 = vadd.f32 %v318, %v357
  %v361 = vadd.f32 %v321, %v357
  %vm362 = vcmp.gt.f32.partialorder %v358, 0.0
  %vm363 = vcmp.gt.f32.partialorder %v359, 0.0
  %vm364 = vcmp.gt.f32.partialorder %v360, 0.0
  %vm365 = vcmp.gt.f32.partialorder %v361, 0.0
  %v366 = vmul.f32 %v358, 0.2
  %v367 = vmul.f32 %v359, 0.2
  %v368 = vmul.f32 %v360, 0.2
  %v369 = vmul.f32 %v361, 0.2
  %v370 = vsel %vm362, %v358, %v366
  %v371 = vsel %vm363, %v359, %v367
  %v372 = vsel %vm364, %v360, %v368
  %v373 = vsel %vm365, %v361, %v369
  %vm374 = vcmp.gt.f32.partialorder %v161, 0.0
  %vm375 = vcmp.gt.f32.partialorder %v162, 0.0
  %vm376 = vcmp.gt.f32.partialorder %v163, 0.0
  %vm377 = vcmp.gt.f32.partialorder %v164, 0.0
  %v378 = vsel %vm374, %v370, -1e+30
  %v379 = vsel %vm375, %v371, -1e+30
  %v380 = vsel %vm376, %v372, -1e+30
  %v381 = vsel %vm377, %v373, -1e+30
  %v382 = vsel %vm289, %v378, -inf
  %383 = vmax.xlane.f32.xlu0 %v382
  %v384 = vpop.xlane.xlu0 %383
  %v385 = vsel %vm289, %v379, -inf
  %386 = vmax.xlane.f32.xlu0 %v385
  %v387 = vpop.xlane.xlu0 %386
  %v388 = vsel %vm289, %v380, -inf
  %389 = vmax.xlane.f32.xlu0 %v388
  %v390 = vpop.xlane.xlu0 %389
  %v391 = vsel %vm289, %v381, -inf
  %392 = vmax.xlane.f32.xlu0 %v391
  %v393 = vpop.xlane.xlu0 %392
  %v394 = vsub.f32 %v378, %v384
  %v395 = vsub.f32 %v379, %v387
  %v396 = vsub.f32 %v380, %v390
  %v397 = vsub.f32 %v381, %v393
  %v398 = vmul.f32 %v394, 1.442695
  %v399 = vpow.pop %v398
  %v400 = vmul.f32 %v395, 1.442695
  %v401 = vpow.pop %v400
  %v402 = vmul.f32 %v396, 1.442695
  %v403 = vpow.pop %v402
  %v404 = vmul.f32 %v397, 1.442695
  %v405 = vpow.pop %v404
  %v406 = vmul.f32 %v161, %v399
  %v407 = vmul.f32 %v162, %v401
  %v408 = vmul.f32 %v163, %v403
  %v409 = vmul.f32 %v164, %v405
  %v410 = vsel %vm289, %v406, 0.0
  %411 = vadd.xlane.f32.xlu0 %v410
  %v412 = vpop.xlane.xlu0 %411
  %v413 = vsel %vm289, %v407, 0.0
  %414 = vadd.xlane.f32.xlu0 %v413
  %v415 = vpop.xlane.xlu0 %414
  %v416 = vsel %vm289, %v408, 0.0
  %417 = vadd.xlane.f32.xlu0 %v416
  %v418 = vpop.xlane.xlu0 %417
  %v419 = vsel %vm289, %v409, 0.0
  %420 = vadd.xlane.f32.xlu0 %v419
  %v421 = vpop.xlane.xlu0 %420
  %v423 = vsel %vm289, %v406, 0
  %v426 = vsel %vm289, %v407, 0
  %v429 = vsel %vm289, %v408, 0
  %v432 = vsel %vm289, %v409, 0
  %434 = vmatprep.subr.mxu0 0.0
  %435 = vmatpush1.msra.mxu0 0.0
  %436 = vmatprep.subr.mxu0 0.0
  %437 = vmatpush1.msra.mxu0 0.0
  %438 = vmatprep.subr.mxu0 0.0
  %439 = vmatpush1.msra.mxu0 0.0
  %440 = vmatprep.subr.mxu0 0.0
  %441 = vmatpush1.msra.mxu0 0.0
  %442 = vmatprep.subr.mxu0 0.0
  %443 = vmatpush1.msra.mxu0 0.0
  %444 = vmatprep.subr.mxu0 0.0
  %445 = vmatpush1.msra.mxu0 0.0
  %446 = vmatprep.subr.mxu0 0.0
  %447 = vmatpush1.msra.mxu0 0.0
  %448 = vmatprep.subr.mxu0 0.0
  %449 = vmatpush1.msra.mxu0 0.0
  %450 = vmatprep.subr.mxu0 0.0
  %451 = vmatpush1.msra.mxu0 0.0
  %452 = vmatprep.subr.mxu0 0.0
  %453 = vmatpush1.msra.mxu0 0.0
  %454 = vmatprep.subr.mxu0 0.0
  %455 = vmatpush1.msra.mxu0 0.0
  %456 = vmatprep.subr.mxu0 0.0
  %457 = vmatpush1.msra.mxu0 0.0
  %458 = vmatprep.subr.mxu0 0.0
  %459 = vmatpush1.msra.mxu0 %v278
  %460 = vmatprep.subr.mxu0 0.0
  %461 = vmatpush1.msra.mxu0 %v273
  %462 = vmatprep.subr.mxu0 0.0
  %463 = vmatpush1.msra.mxu0 %v268
  %464 = vmatprep.subr.mxu0 0.0
  %465 = vmatpush1.msra.mxu0 %v263
  %466 = vmatprep.subr.mxu0 0.0
  %467 = vmatpush2.msra.mxu0 0.0
  %468 = vmatprep.subr.mxu0 0.0
  %469 = vmatpush2.msra.mxu0 0.0
  %470 = vmatprep.subr.mxu0 0.0
  %471 = vmatpush2.msra.mxu0 0.0
  %472 = vmatprep.subr.mxu0 0.0
  %473 = vmatpush2.msra.mxu0 0.0
  %474 = vmatprep.subr.mxu0 0.0
  %475 = vmatpush2.msra.mxu0 0.0
  %476 = vmatprep.subr.mxu0 0.0
  %477 = vmatpush2.msra.mxu0 0.0
  %478 = vmatprep.subr.mxu0 0.0
  %479 = vmatpush2.msra.mxu0 0.0
  %480 = vmatprep.subr.mxu0 0.0
  %481 = vmatpush2.msra.mxu0 0.0
  %482 = vmatprep.subr.mxu0 0.0
  %483 = vmatpush2.msra.mxu0 0.0
  %484 = vmatprep.subr.mxu0 0.0
  %485 = vmatpush2.msra.mxu0 0.0
  %486 = vmatprep.subr.mxu0 0.0
  %487 = vmatpush2.msra.mxu0 0.0
  %488 = vmatprep.subr.mxu0 0.0
  %489 = vmatpush2.msra.mxu0 0.0
  %490 = vmatprep.subr.mxu0 0.0
  %491 = vmatpush2.msra.mxu0 0.0
  %492 = vmatprep.subr.mxu0 0.0
  %493 = vmatpush2.msra.mxu0 0.0
  %494 = vmatprep.subr.mxu0 0.0
  %495 = vmatpush2.msra.mxu0 0.0
  %496 = vmatprep.subr.mxu0 0.0
  %497 = vmatpush2.msra.mxu0 0.0
  %498 = vmatprep.mubr.f32.mxu0 0.0
  %499 = vmatmul.mubr.f32.gmra.mxu0 %v423
  %v500 = vpop.f32.mrf.mxu0
  %v501 = vadd.f32 0.0, %v500
  %v502 = vpop.f32.mrf.mxu0
  %503 = vmatprep.mubr.f32.mxu0 0.0
  %504 = vmatmul.mubr.f32.gmra.mxu0 %v426
  %v505 = vpop.f32.mrf.mxu0
  %v506 = vadd.f32 0.0, %v505
  %v507 = vpop.f32.mrf.mxu0
  %508 = vmatprep.mubr.f32.mxu0 0.0
  %509 = vmatmul.mubr.f32.gmra.mxu0 %v429
  %v510 = vpop.f32.mrf.mxu0
  %v511 = vadd.f32 0.0, %v510
  %v512 = vpop.f32.mrf.mxu0
  %513 = vmatprep.mubr.f32.mxu0 0.0
  %514 = vmatmul.mubr.f32.gmra.mxu0 %v432
  %v515 = vpop.f32.mrf.mxu0
  %v516 = vadd.f32 0.0, %v515
  %v517 = vpop.f32.mrf.mxu0
  %518 = vdwg.mxu0
  %v519 = vrcp.pop %v412
  %v520 = vmul.f32 %v501, %v519
  %v521 = vrcp.pop %v415
  %v522 = vmul.f32 %v506, %v521
  %v523 = vrcp.pop %v418
  %v524 = vmul.f32 %v511, %v523
  %v525 = vrcp.pop %v421
  %v526 = vmul.f32 %v516, %v525
  %v527 = vlaneseq
  %v528 = vshrl.u32 %v527, 7
  %v529 = vsub.s32 0, %v528
  %v530 = vrot.slane %v176, %v529
  %v531 = vadd.f32 %v520, %v530
  %v532 = vadd.f32 %v522, %v530
  %v533 = vadd.f32 %v524, %v530
  %v534 = vadd.f32 %v526, %v530
  %vm535 = vcmp.gt.f32.partialorder %v531, 0.0
  %vm536 = vcmp.gt.f32.partialorder %v532, 0.0
  %vm537 = vcmp.gt.f32.partialorder %v533, 0.0
  %vm538 = vcmp.gt.f32.partialorder %v534, 0.0
  %v539 = vmin.f32 %v531, 0.0
  %v540 = vmin.f32 %v532, 0.0
  %v541 = vmin.f32 %v533, 0.0
  %v542 = vmin.f32 %v534, 0.0
  %v543 = vmul.f32 %v539, 1.442695
  %v544 = vpow.pop %v543
  %v545 = vmul.f32 %v540, 1.442695
  %v546 = vpow.pop %v545
  %v547 = vmul.f32 %v541, 1.442695
  %v548 = vpow.pop %v547
  %v549 = vmul.f32 %v542, 1.442695
  %v550 = vpow.pop %v549
  %v551 = vsub.f32 %v544, 1.0
  %v552 = vsub.f32 %v546, 1.0
  %v553 = vsub.f32 %v548, 1.0
  %v554 = vsub.f32 %v550, 1.0
  %v555 = vsel %vm535, %v531, %v551
  %v556 = vsel %vm536, %v532, %v552
  %v557 = vsel %vm537, %v533, %v553
  %v558 = vsel %vm538, %v534, %v554
  %v560 = vsel %vm289, %v555, 0
  %v563 = vsel %vm289, %v556, 0
  %v566 = vsel %vm289, %v557, 0
  %v569 = vsel %vm289, %v558, 0
  %571 = vmatprep.subr.mxu0 0.0
  %572 = vmatpush1.msra.mxu0 0.0
  %573 = vmatprep.subr.mxu0 0.0
  %574 = vmatpush1.msra.mxu0 0.0
  %575 = vmatprep.subr.mxu0 0.0
  %576 = vmatpush1.msra.mxu0 0.0
  %577 = vmatprep.subr.mxu0 0.0
  %578 = vmatpush1.msra.mxu0 0.0
  %579 = vmatprep.subr.mxu0 0.0
  %580 = vmatpush1.msra.mxu0 0.0
  %581 = vmatprep.subr.mxu0 0.0
  %582 = vmatpush1.msra.mxu0 0.0
  %583 = vmatprep.subr.mxu0 0.0
  %584 = vmatpush1.msra.mxu0 0.0
  %585 = vmatprep.subr.mxu0 0.0
  %586 = vmatpush1.msra.mxu0 0.0
  %587 = vmatprep.subr.mxu0 0.0
  %588 = vmatpush1.msra.mxu0 0.0
  %589 = vmatprep.subr.mxu0 0.0
  %590 = vmatpush1.msra.mxu0 0.0
  %591 = vmatprep.subr.mxu0 0.0
  %592 = vmatpush1.msra.mxu0 0.0
  %593 = vmatprep.subr.mxu0 0.0
  %594 = vmatpush1.msra.mxu0 0.0
  %595 = vmatprep.subr.mxu0 0.0
  %596 = vmatpush1.msra.mxu0 %v169
  %597 = vmatprep.subr.mxu0 0.0
  %598 = vmatpush1.msra.mxu0 %v168
  %599 = vmatprep.subr.mxu0 0.0
  %600 = vmatpush1.msra.mxu0 %v167
  %601 = vmatprep.subr.mxu0 0.0
  %602 = vmatpush1.msra.mxu0 %v166
  %603 = vmatprep.subr.mxu0 0.0
  %604 = vmatpush2.msra.mxu0 0.0
  %605 = vmatprep.subr.mxu0 0.0
  %606 = vmatpush2.msra.mxu0 0.0
  %607 = vmatprep.subr.mxu0 0.0
  %608 = vmatpush2.msra.mxu0 0.0
  %609 = vmatprep.subr.mxu0 0.0
  %610 = vmatpush2.msra.mxu0 0.0
  %611 = vmatprep.subr.mxu0 0.0
  %612 = vmatpush2.msra.mxu0 0.0
  %613 = vmatprep.subr.mxu0 0.0
  %614 = vmatpush2.msra.mxu0 0.0
  %615 = vmatprep.subr.mxu0 0.0
  %616 = vmatpush2.msra.mxu0 0.0
  %617 = vmatprep.subr.mxu0 0.0
  %618 = vmatpush2.msra.mxu0 0.0
  %619 = vmatprep.subr.mxu0 0.0
  %620 = vmatpush2.msra.mxu0 0.0
  %621 = vmatprep.subr.mxu0 0.0
  %622 = vmatpush2.msra.mxu0 0.0
  %623 = vmatprep.subr.mxu0 0.0
  %624 = vmatpush2.msra.mxu0 0.0
  %625 = vmatprep.subr.mxu0 0.0
  %626 = vmatpush2.msra.mxu0 0.0
  %627 = vmatprep.subr.mxu0 0.0
  %628 = vmatpush2.msra.mxu0 0.0
  %629 = vmatprep.subr.mxu0 0.0
  %630 = vmatpush2.msra.mxu0 0.0
  %631 = vmatprep.subr.mxu0 0.0
  %632 = vmatpush2.msra.mxu0 0.0
  %633 = vmatprep.subr.mxu0 0.0
  %634 = vmatpush2.msra.mxu0 0.0
  %635 = vmatprep.mubr.f32.mxu0 0.0
  %636 = vmatmul.mubr.f32.gmra.mxu0 %v560
  %v637 = vpop.f32.mrf.mxu0
  %v638 = vadd.f32 0.0, %v637
  %v639 = vpop.f32.mrf.mxu0
  %640 = vmatprep.mubr.f32.mxu0 0.0
  %641 = vmatmul.mubr.f32.gmra.mxu0 %v563
  %v642 = vpop.f32.mrf.mxu0
  %v643 = vadd.f32 0.0, %v642
  %v644 = vpop.f32.mrf.mxu0
  %645 = vmatprep.mubr.f32.mxu0 0.0
  %646 = vmatmul.mubr.f32.gmra.mxu0 %v566
  %v647 = vpop.f32.mrf.mxu0
  %v648 = vadd.f32 0.0, %v647
  %v649 = vpop.f32.mrf.mxu0
  %650 = vmatprep.mubr.f32.mxu0 0.0
  %651 = vmatmul.mubr.f32.gmra.mxu0 %v569
  %v652 = vpop.f32.mrf.mxu0
  %v653 = vadd.f32 0.0, %v652
  %v654 = vpop.f32.mrf.mxu0
  %655 = vdwg.mxu0
  %v656 = vlaneseq
  %v657 = vshrl.u32 %v656, 7
  %v658 = vsub.s32 0, %v657
  %v659 = vrot.slane %v177, %v658
  %v660 = vmul.f32 %v638, %v659
  %v661 = vmul.f32 %v643, %v659
  %v662 = vmul.f32 %v648, %v659
  %v663 = vmul.f32 %v653, %v659
  %v664 = vsel %vm289, %v660, 0.0
  %665 = vadd.xlane.f32.xlu0 %v664
  %v666 = vpop.xlane.xlu0 %665
  %v667 = vsel %vm289, %v661, 0.0
  %668 = vadd.xlane.f32.xlu0 %v667
  %v669 = vpop.xlane.xlu0 %668
  %v670 = vsel %vm289, %v662, 0.0
  %671 = vadd.xlane.f32.xlu0 %v670
  %v672 = vpop.xlane.xlu0 %671
  %v673 = vsel %vm289, %v663, 0.0
  %674 = vadd.xlane.f32.xlu0 %v673
  %v675 = vpop.xlane.xlu0 %674
  %v676 = vlaneseq
  %v677 = vshrl.u32 %v676, 7
  %v678 = vsub.s32 0, %v677
  %v679 = vrot.slane %v178, %v678
  %v680 = vmul.f32 %v638, %v679
  %v681 = vmul.f32 %v643, %v679
  %v682 = vmul.f32 %v648, %v679
  %v683 = vmul.f32 %v653, %v679
  %v684 = vsel %vm289, %v680, 0.0
  %685 = vadd.xlane.f32.xlu0 %v684
  %v686 = vpop.xlane.xlu0 %685
  %v687 = vsel %vm289, %v681, 0.0
  %688 = vadd.xlane.f32.xlu0 %v687
  %v689 = vpop.xlane.xlu0 %688
  %v690 = vsel %vm289, %v682, 0.0
  %691 = vadd.xlane.f32.xlu0 %v690
  %v692 = vpop.xlane.xlu0 %691
  %v693 = vsel %vm289, %v683, 0.0
  %694 = vadd.xlane.f32.xlu0 %v693
  %v695 = vpop.xlane.xlu0 %694
  %696 = vxpose.xlu0.b32.start [1/16] %v666, 128
  %697 = vxpose.xlu0.b32.cont [2/16] %v669, 128
  %698 = vxpose.xlu0.b32.cont [3/16] %v672, 128
  %699 = vxpose.xlu0.b32.cont [4/16] %v675, 128
  %700 = vxpose.xlu0.b32.cont [5/16] 0.0, 128
  %701 = vxpose.xlu0.b32.cont [6/16] 0.0, 128
  %702 = vxpose.xlu0.b32.cont [7/16] 0.0, 128
  %703 = vxpose.xlu0.b32.cont [8/16] 0.0, 128
  %704 = vxpose.xlu0.b32.cont [9/16] 0.0, 128
  %705 = vxpose.xlu0.b32.cont [10/16] 0.0, 128
  %706 = vxpose.xlu0.b32.cont [11/16] 0.0, 128
  %707 = vxpose.xlu0.b32.cont [12/16] 0.0, 128
  %708 = vxpose.xlu0.b32.cont [13/16] 0.0, 128
  %709 = vxpose.xlu0.b32.cont [14/16] 0.0, 128
  %710 = vxpose.xlu0.b32.cont [15/16] 0.0, 128
  %711 = vxpose.xlu0.b32.end [16/16] 0.0, 128
  %v712 = vpop.trf.xlu0
  %v713 = vpop.trf.xlu0
  %v714 = vpop.trf.xlu0
  %v715 = vpop.trf.xlu0
  %v716 = vpop.trf.xlu0
  %v717 = vpop.trf.xlu0
  %v718 = vpop.trf.xlu0
  %v719 = vpop.trf.xlu0
  %v720 = vpop.trf.xlu0
  %v721 = vpop.trf.xlu0
  %v722 = vpop.trf.xlu0
  %v723 = vpop.trf.xlu0
  %v724 = vpop.trf.xlu0
  %v725 = vpop.trf.xlu0
  %v726 = vpop.trf.xlu0
  %v727 = vpop.trf.xlu0
  %v728 = vlaneseq
  %v729 = vshrl.u32 %v728, 7
  %v730 = vsub.s32 0, %v729
  %v731 = vrot.slane %v712, %v730
  %v732 = vadd.f32 %v686, %v731
  %v733 = vadd.f32 %v689, %v731
  %v734 = vadd.f32 %v692, %v731
  %v735 = vadd.f32 %v695, %v731
  %vm736 = vcmp.gt.f32.partialorder %v732, 0.0
  %vm737 = vcmp.gt.f32.partialorder %v733, 0.0
  %vm738 = vcmp.gt.f32.partialorder %v734, 0.0
  %vm739 = vcmp.gt.f32.partialorder %v735, 0.0
  %v740 = vmul.f32 %v732, 0.2
  %v741 = vmul.f32 %v733, 0.2
  %v742 = vmul.f32 %v734, 0.2
  %v743 = vmul.f32 %v735, 0.2
  %v744 = vsel %vm736, %v732, %v740
  %v745 = vsel %vm737, %v733, %v741
  %v746 = vsel %vm738, %v734, %v742
  %v747 = vsel %vm739, %v735, %v743
  %v748 = vsel %vm374, %v744, -1e+30
  %v749 = vsel %vm375, %v745, -1e+30
  %v750 = vsel %vm376, %v746, -1e+30
  %v751 = vsel %vm377, %v747, -1e+30
  %v752 = vsel %vm289, %v748, -inf
  %753 = vmax.xlane.f32.xlu0 %v752
  %v754 = vpop.xlane.xlu0 %753
  %v755 = vsel %vm289, %v749, -inf
  %756 = vmax.xlane.f32.xlu0 %v755
  %v757 = vpop.xlane.xlu0 %756
  %v758 = vsel %vm289, %v750, -inf
  %759 = vmax.xlane.f32.xlu0 %v758
  %v760 = vpop.xlane.xlu0 %759
  %v761 = vsel %vm289, %v751, -inf
  %762 = vmax.xlane.f32.xlu0 %v761
  %v763 = vpop.xlane.xlu0 %762
  %v764 = vsub.f32 %v748, %v754
  %v765 = vsub.f32 %v749, %v757
  %v766 = vsub.f32 %v750, %v760
  %v767 = vsub.f32 %v751, %v763
  %v768 = vmul.f32 %v764, 1.442695
  %v769 = vpow.pop %v768
  %v770 = vmul.f32 %v765, 1.442695
  %v771 = vpow.pop %v770
  %v772 = vmul.f32 %v766, 1.442695
  %v773 = vpow.pop %v772
  %v774 = vmul.f32 %v767, 1.442695
  %v775 = vpow.pop %v774
  %v776 = vmul.f32 %v161, %v769
  %v777 = vmul.f32 %v162, %v771
  %v778 = vmul.f32 %v163, %v773
  %v779 = vmul.f32 %v164, %v775
  %v780 = vsel %vm289, %v776, 0.0
  %781 = vadd.xlane.f32.xlu0 %v780
  %v782 = vpop.xlane.xlu0 %781
  %v783 = vsel %vm289, %v777, 0.0
  %784 = vadd.xlane.f32.xlu0 %v783
  %v785 = vpop.xlane.xlu0 %784
  %v786 = vsel %vm289, %v778, 0.0
  %787 = vadd.xlane.f32.xlu0 %v786
  %v788 = vpop.xlane.xlu0 %787
  %v789 = vsel %vm289, %v779, 0.0
  %790 = vadd.xlane.f32.xlu0 %v789
  %v791 = vpop.xlane.xlu0 %790
  %v793 = vsel %vm289, %v776, 0
  %v796 = vsel %vm289, %v777, 0
  %v799 = vsel %vm289, %v778, 0
  %v802 = vsel %vm289, %v779, 0
  %804 = vmatprep.subr.mxu0 0.0
  %805 = vmatpush1.msra.mxu0 0.0
  %806 = vmatprep.subr.mxu0 0.0
  %807 = vmatpush1.msra.mxu0 0.0
  %808 = vmatprep.subr.mxu0 0.0
  %809 = vmatpush1.msra.mxu0 0.0
  %810 = vmatprep.subr.mxu0 0.0
  %811 = vmatpush1.msra.mxu0 0.0
  %812 = vmatprep.subr.mxu0 0.0
  %813 = vmatpush1.msra.mxu0 0.0
  %814 = vmatprep.subr.mxu0 0.0
  %815 = vmatpush1.msra.mxu0 0.0
  %816 = vmatprep.subr.mxu0 0.0
  %817 = vmatpush1.msra.mxu0 0.0
  %818 = vmatprep.subr.mxu0 0.0
  %819 = vmatpush1.msra.mxu0 0.0
  %820 = vmatprep.subr.mxu0 0.0
  %821 = vmatpush1.msra.mxu0 0.0
  %822 = vmatprep.subr.mxu0 0.0
  %823 = vmatpush1.msra.mxu0 0.0
  %824 = vmatprep.subr.mxu0 0.0
  %825 = vmatpush1.msra.mxu0 0.0
  %826 = vmatprep.subr.mxu0 0.0
  %827 = vmatpush1.msra.mxu0 0.0
  %828 = vmatprep.subr.mxu0 0.0
  %829 = vmatpush1.msra.mxu0 %v653
  %830 = vmatprep.subr.mxu0 0.0
  %831 = vmatpush1.msra.mxu0 %v648
  %832 = vmatprep.subr.mxu0 0.0
  %833 = vmatpush1.msra.mxu0 %v643
  %834 = vmatprep.subr.mxu0 0.0
  %835 = vmatpush1.msra.mxu0 %v638
  %836 = vmatprep.subr.mxu0 0.0
  %837 = vmatpush2.msra.mxu0 0.0
  %838 = vmatprep.subr.mxu0 0.0
  %839 = vmatpush2.msra.mxu0 0.0
  %840 = vmatprep.subr.mxu0 0.0
  %841 = vmatpush2.msra.mxu0 0.0
  %842 = vmatprep.subr.mxu0 0.0
  %843 = vmatpush2.msra.mxu0 0.0
  %844 = vmatprep.subr.mxu0 0.0
  %845 = vmatpush2.msra.mxu0 0.0
  %846 = vmatprep.subr.mxu0 0.0
  %847 = vmatpush2.msra.mxu0 0.0
  %848 = vmatprep.subr.mxu0 0.0
  %849 = vmatpush2.msra.mxu0 0.0
  %850 = vmatprep.subr.mxu0 0.0
  %851 = vmatpush2.msra.mxu0 0.0
  %852 = vmatprep.subr.mxu0 0.0
  %853 = vmatpush2.msra.mxu0 0.0
  %854 = vmatprep.subr.mxu0 0.0
  %855 = vmatpush2.msra.mxu0 0.0
  %856 = vmatprep.subr.mxu0 0.0
  %857 = vmatpush2.msra.mxu0 0.0
  %858 = vmatprep.subr.mxu0 0.0
  %859 = vmatpush2.msra.mxu0 0.0
  %860 = vmatprep.subr.mxu0 0.0
  %861 = vmatpush2.msra.mxu0 0.0
  %862 = vmatprep.subr.mxu0 0.0
  %863 = vmatpush2.msra.mxu0 0.0
  %864 = vmatprep.subr.mxu0 0.0
  %865 = vmatpush2.msra.mxu0 0.0
  %866 = vmatprep.subr.mxu0 0.0
  %867 = vmatpush2.msra.mxu0 0.0
  %868 = vmatprep.mubr.f32.mxu0 0.0
  %869 = vmatmul.mubr.f32.gmra.mxu0 %v793
  %v870 = vpop.f32.mrf.mxu0
  %v871 = vadd.f32 0.0, %v870
  %v872 = vpop.f32.mrf.mxu0
  %873 = vmatprep.mubr.f32.mxu0 0.0
  %874 = vmatmul.mubr.f32.gmra.mxu0 %v796
  %v875 = vpop.f32.mrf.mxu0
  %v876 = vadd.f32 0.0, %v875
  %v877 = vpop.f32.mrf.mxu0
  %878 = vmatprep.mubr.f32.mxu0 0.0
  %879 = vmatmul.mubr.f32.gmra.mxu0 %v799
  %v880 = vpop.f32.mrf.mxu0
  %v881 = vadd.f32 0.0, %v880
  %v882 = vpop.f32.mrf.mxu0
  %883 = vmatprep.mubr.f32.mxu0 0.0
  %884 = vmatmul.mubr.f32.gmra.mxu0 %v802
  %v885 = vpop.f32.mrf.mxu0
  %v886 = vadd.f32 0.0, %v885
  %v887 = vpop.f32.mrf.mxu0
  %888 = vdwg.mxu0
  %v889 = vrcp.pop %v782
  %v890 = vmul.f32 %v871, %v889
  %v891 = vrcp.pop %v785
  %v892 = vmul.f32 %v876, %v891
  %v893 = vrcp.pop %v788
  %v894 = vmul.f32 %v881, %v893
  %v895 = vrcp.pop %v791
  %v896 = vmul.f32 %v886, %v895
  %v897 = vlaneseq
  %v898 = vshrl.u32 %v897, 7
  %v899 = vsub.s32 0, %v898
  %v900 = vrot.slane %v179, %v899
  %v901 = vadd.f32 %v890, %v900
  %v902 = vadd.f32 %v892, %v900
  %v903 = vadd.f32 %v894, %v900
  %v904 = vadd.f32 %v896, %v900
  %vm905 = vcmp.gt.f32.partialorder %v901, 0.0
  %vm906 = vcmp.gt.f32.partialorder %v902, 0.0
  %vm907 = vcmp.gt.f32.partialorder %v903, 0.0
  %vm908 = vcmp.gt.f32.partialorder %v904, 0.0
  %v909 = vmin.f32 %v901, 0.0
  %v910 = vmin.f32 %v902, 0.0
  %v911 = vmin.f32 %v903, 0.0
  %v912 = vmin.f32 %v904, 0.0
  %v913 = vmul.f32 %v909, 1.442695
  %v914 = vpow.pop %v913
  %v915 = vmul.f32 %v910, 1.442695
  %v916 = vpow.pop %v915
  %v917 = vmul.f32 %v911, 1.442695
  %v918 = vpow.pop %v917
  %v919 = vmul.f32 %v912, 1.442695
  %v920 = vpow.pop %v919
  %v921 = vsub.f32 %v914, 1.0
  %v922 = vsub.f32 %v916, 1.0
  %v923 = vsub.f32 %v918, 1.0
  %v924 = vsub.f32 %v920, 1.0
  %v925 = vsel %vm905, %v901, %v921
  %v926 = vsel %vm906, %v902, %v922
  %v927 = vsel %vm907, %v903, %v923
  %v928 = vsel %vm908, %v904, %v924
  %v929 = vld [vmem:[%s2] sm:$0x1]
  %v930 = vld [vmem:[%s2 + $0x1] sm:$0x1]
  %v931 = vlaneseq
  %v932 = vshrl.u32 %v931, 7
  %v933 = vsub.s32 0, %v932
  %v934 = vrot.slane %v930, %v933
  %vm935 = vcmp.eq.s32.totalorder %v26, %v934
  %vm936 = vcmp.gt.s32.totalorder %v929, 0
  %v937 = vsel %vm936, 1, 0
  %v938 = vlaneseq
  %v939 = vshrl.u32 %v938, 7
  %v940 = vsub.s32 0, %v939
  %v941 = vrot.slane %v937, %v940
  %vm942 = vcmp.eq.s32.totalorder %v941, 1
  %vm943 = vmand %vm935, %vm942
  %v944 = vsel %vm943, 1.0, 0.0
  %vm945 = vcmask 254976
  %v946 = vsel %vm945, %v944, 0.0
  %947 = vadd.xlane.f32.xlu0 %v946
  %v948 = vpop.xlane.xlu0 %947
  %v950 = vsel %vm289, %v944, 0
  %952 = vmatprep.subr.mxu0 0.0
  %953 = vmatpush1.msra.mxu0 0.0
  %954 = vmatprep.subr.mxu0 0.0
  %955 = vmatpush1.msra.mxu0 0.0
  %956 = vmatprep.subr.mxu0 0.0
  %957 = vmatpush1.msra.mxu0 0.0
  %958 = vmatprep.subr.mxu0 0.0
  %959 = vmatpush1.msra.mxu0 0.0
  %960 = vmatprep.subr.mxu0 0.0
  %961 = vmatpush1.msra.mxu0 0.0
  %962 = vmatprep.subr.mxu0 0.0
  %963 = vmatpush1.msra.mxu0 0.0
  %964 = vmatprep.subr.mxu0 0.0
  %965 = vmatpush1.msra.mxu0 0.0
  %966 = vmatprep.subr.mxu0 0.0
  %967 = vmatpush1.msra.mxu0 0.0
  %968 = vmatprep.subr.mxu0 0.0
  %969 = vmatpush1.msra.mxu0 0.0
  %970 = vmatprep.subr.mxu0 0.0
  %971 = vmatpush1.msra.mxu0 0.0
  %972 = vmatprep.subr.mxu0 0.0
  %973 = vmatpush1.msra.mxu0 0.0
  %974 = vmatprep.subr.mxu0 0.0
  %975 = vmatpush1.msra.mxu0 0.0
  %976 = vmatprep.subr.mxu0 0.0
  %977 = vmatpush1.msra.mxu0 %v928
  %978 = vmatprep.subr.mxu0 0.0
  %979 = vmatpush1.msra.mxu0 %v927
  %980 = vmatprep.subr.mxu0 0.0
  %981 = vmatpush1.msra.mxu0 %v926
  %982 = vmatprep.subr.mxu0 0.0
  %983 = vmatpush1.msra.mxu0 %v925
  %984 = vmatprep.subr.mxu0 0.0
  %985 = vmatpush2.msra.mxu0 0.0
  %986 = vmatprep.subr.mxu0 0.0
  %987 = vmatpush2.msra.mxu0 0.0
  %988 = vmatprep.subr.mxu0 0.0
  %989 = vmatpush2.msra.mxu0 0.0
  %990 = vmatprep.subr.mxu0 0.0
  %991 = vmatpush2.msra.mxu0 0.0
  %992 = vmatprep.subr.mxu0 0.0
  %993 = vmatpush2.msra.mxu0 0.0
  %994 = vmatprep.subr.mxu0 0.0
  %995 = vmatpush2.msra.mxu0 0.0
  %996 = vmatprep.subr.mxu0 0.0
  %997 = vmatpush2.msra.mxu0 0.0
  %998 = vmatprep.subr.mxu0 0.0
  %999 = vmatpush2.msra.mxu0 0.0
  %1000 = vmatprep.subr.mxu0 0.0
  %1001 = vmatpush2.msra.mxu0 0.0
  %1002 = vmatprep.subr.mxu0 0.0
  %1003 = vmatpush2.msra.mxu0 0.0
  %1004 = vmatprep.subr.mxu0 0.0
  %1005 = vmatpush2.msra.mxu0 0.0
  %1006 = vmatprep.subr.mxu0 0.0
  %1007 = vmatpush2.msra.mxu0 0.0
  %1008 = vmatprep.subr.mxu0 0.0
  %1009 = vmatpush2.msra.mxu0 0.0
  %1010 = vmatprep.subr.mxu0 0.0
  %1011 = vmatpush2.msra.mxu0 0.0
  %1012 = vmatprep.subr.mxu0 0.0
  %1013 = vmatpush2.msra.mxu0 0.0
  %1014 = vmatprep.subr.mxu0 0.0
  %1015 = vmatpush2.msra.mxu0 0.0
  %1016 = vmatprep.mubr.f32.mxu0 0.0
  %1017 = vmatmul.mubr.f32.gmra.mxu0 %v950
  %v1018 = vpop.f32.mrf.mxu0
  %v1019 = vadd.f32 0.0, %v1018
  %v1020 = vpop.f32.mrf.mxu0
  %1021 = vdwg.mxu0
  %v1022 = vmax.f32 %v948, 1.0
  %v1023 = vrcp.pop %v1022
  %v1024 = vmul.f32 %v1019, %v1023
  %v1025 = vlaneseq
  %v1026 = vshrl.u32 %v1025, 7
  %v1027 = vsub.s32 0, %v1026
  %v1028 = vrot.slane %v180, %v1027
  %v1030 = vsel %vm289, %v1024, 0
  %1032 = vmatprep.subr.mxu0 0.0
  %1033 = vmatpush1.msra.mxu0 0.0
  %1034 = vmatprep.subr.mxu0 0.0
  %1035 = vmatpush1.msra.mxu0 0.0
  %1036 = vmatprep.subr.mxu0 0.0
  %1037 = vmatpush1.msra.mxu0 0.0
  %1038 = vmatprep.subr.mxu0 0.0
  %1039 = vmatpush1.msra.mxu0 0.0
  %1040 = vmatprep.subr.mxu0 0.0
  %1041 = vmatpush1.msra.mxu0 0.0
  %1042 = vmatprep.subr.mxu0 0.0
  %1043 = vmatpush1.msra.mxu0 0.0
  %1044 = vmatprep.subr.mxu0 0.0
  %1045 = vmatpush1.msra.mxu0 0.0
  %1046 = vmatprep.subr.mxu0 0.0
  %1047 = vmatpush1.msra.mxu0 0.0
  %1048 = vmatprep.subr.mxu0 0.0
  %1049 = vmatpush1.msra.mxu0 0.0
  %1050 = vmatprep.subr.mxu0 0.0
  %1051 = vmatpush1.msra.mxu0 0.0
  %1052 = vmatprep.subr.mxu0 0.0
  %1053 = vmatpush1.msra.mxu0 0.0
  %1054 = vmatprep.subr.mxu0 0.0
  %1055 = vmatpush1.msra.mxu0 0.0
  %1056 = vmatprep.subr.mxu0 0.0
  %1057 = vmatpush1.msra.mxu0 %v173
  %1058 = vmatprep.subr.mxu0 0.0
  %1059 = vmatpush1.msra.mxu0 %v172
  %1060 = vmatprep.subr.mxu0 0.0
  %1061 = vmatpush1.msra.mxu0 %v171
  %1062 = vmatprep.subr.mxu0 0.0
  %1063 = vmatpush1.msra.mxu0 %v170
  %1064 = vmatprep.subr.mxu0 0.0
  %1065 = vmatpush2.msra.mxu0 0.0
  %1066 = vmatprep.subr.mxu0 0.0
  %1067 = vmatpush2.msra.mxu0 0.0
  %1068 = vmatprep.subr.mxu0 0.0
  %1069 = vmatpush2.msra.mxu0 0.0
  %1070 = vmatprep.subr.mxu0 0.0
  %1071 = vmatpush2.msra.mxu0 0.0
  %1072 = vmatprep.subr.mxu0 0.0
  %1073 = vmatpush2.msra.mxu0 0.0
  %1074 = vmatprep.subr.mxu0 0.0
  %1075 = vmatpush2.msra.mxu0 0.0
  %1076 = vmatprep.subr.mxu0 0.0
  %1077 = vmatpush2.msra.mxu0 0.0
  %1078 = vmatprep.subr.mxu0 0.0
  %1079 = vmatpush2.msra.mxu0 0.0
  %1080 = vmatprep.subr.mxu0 0.0
  %1081 = vmatpush2.msra.mxu0 0.0
  %1082 = vmatprep.subr.mxu0 0.0
  %1083 = vmatpush2.msra.mxu0 0.0
  %1084 = vmatprep.subr.mxu0 0.0
  %1085 = vmatpush2.msra.mxu0 0.0
  %1086 = vmatprep.subr.mxu0 0.0
  %1087 = vmatpush2.msra.mxu0 0.0
  %1088 = vmatprep.subr.mxu0 0.0
  %1089 = vmatpush2.msra.mxu0 0.0
  %1090 = vmatprep.subr.mxu0 0.0
  %1091 = vmatpush2.msra.mxu0 0.0
  %1092 = vmatprep.subr.mxu0 0.0
  %1093 = vmatpush2.msra.mxu0 0.0
  %1094 = vmatprep.subr.mxu0 0.0
  %1095 = vmatpush2.msra.mxu0 0.0
  %1096 = vmatprep.mubr.f32.mxu0 0.0
  %1097 = vmatmul.mubr.f32.gmra.mxu0 %v1030
  %v1098 = vpop.f32.mrf.mxu0
  %v1099 = vadd.f32 %v1028, %v1098
  %v1100 = vpop.f32.mrf.mxu0
  %1101 = vdwg.mxu0
  %v1102 = vmax.f32 %v1099, 0.0
  %v1103 = vlaneseq
  %v1104 = vshrl.u32 %v1103, 7
  %v1105 = vsub.s32 0, %v1104
  %v1106 = vrot.slane %v181, %v1105
  %v1107 = vmul.f32 %v1102, %v1106
  %v1108 = vsel %vm945, %v1107, 0.0
  %1109 = vadd.xlane.f32.xlu0 %v1108
  %v1110 = vpop.xlane.xlu0 %1109
  %v1111 = vlaneseq
  %v1112 = vshrl.u32 %v1111, 7
  %v1113 = vsub.s32 0, %v1112
  %v1114 = vrot.slane %v182, %v1113
  %v1115 = vadd.f32 %v1110, %v1114
  %vm1116 = vcmask 1024
  %1117 = vst.msk [vmem:[%s5] sm:$0x3] %vm1116, %v1115
  // Predicated region
  $region22: #{critic_forward.1} parent=0 // pred_check
    _
  $region23: #{critic_forward.1} parent=0 // pred_check_branch
    %1119 = sbr.rel (0) target = $region25
  $region24: #{critic_forward.1} parent=0 // pred_region
    _
  $region25: #{critic_forward.1} parent=0 // pred_fallthru
    _
  // Predicated region
  $region26: #{critic_forward.1} parent=0 // pred_check
    _
  $region27: #{critic_forward.1} parent=0 // pred_check_branch
    %1121 = sbr.rel (0) target = $region29
  $region28: #{critic_forward.1} parent=0 // pred_region
    _
  $region29: #{critic_forward.1} parent=0 // pred_fallthru
    _

</llo_original>
